<compile_context>
chip_gen: v7x
topology: tpu7x:2x2x1
jax: 0.10.0
libtpu: 0.0.40
codegen_flags: <defaults>
</compile_context>

<pallas_src>
import jax
import jax.numpy as jnp
import numpy as np
from jax.experimental import pallas as pl
from jax.experimental.pallas import tpu as pltpu


# --------------------------------------------------------------------------- #
# helpers
# --------------------------------------------------------------------------- #
def _round_up(x, m):
    return (x + m - 1) // m * m


def _cdiv(a, b):
    return -(-a // b)


def _sublane_multiple(dtype):
    # sub-32-bit dtypes pack along sublanes: f32 -> 8 rows, bf16 -> 16, int8/fp8 -> 32
    return {4: 8, 2: 16, 1: 32}.get(np.dtype(dtype).itemsize, 8)


def _working_set_bytes(tm, tn, tk, x_bytes, w_bytes, out_bytes):
    # double-buffered x / W / out tiles + worst-case f32 accumulator + bias
    return (2 * tm * tk * x_bytes + 2 * tk * tn * w_bytes
            + 2 * tm * tn * out_bytes + tm * tn * 4 + 2 * tn * 4)


def _vmem_budget_bytes():
    try:
        cap = int(pltpu.get_tpu_info().vmem_capacity_bytes)
    except Exception:
        cap = 64 * 1024 * 1024          # conservative fallback (= v7x physical VMEM)
    # Explicit scoped-VMEM limit: ~48 MiB on v7x (64 MiB physical), 96 MiB on
    # v5e/v6e (128 MiB physical).  This also overrides v5e's 16 MiB scoped default.
    limit = min(cap * 3 // 4, 96 * 1024 * 1024)
    budget = int(limit * 0.85)          # headroom for Mosaic-internal scratch
    return budget, limit


# --------------------------------------------------------------------------- #
# kernels
# --------------------------------------------------------------------------- #
def _linear_kernel_single_k(x_ref, wt_ref, b_ref, o_ref):
    # Whole K in one tile: one MXU pass + bias add + cast.  tn is a multiple
    # of 128 -> lane-dense, unmasked stores.
    o_ref[...] = (jnp.dot(x_ref[...], wt_ref[...],
                          preferred_element_type=jnp.float32)
                  + b_ref[...]).astype(o_ref.dtype)


def _linear_kernel_multi_k_f32_out(x_ref, wt_ref, b_ref, o_ref):
    # f32 output: accumulate directly into the k-invariant output block
    # (no VMEM scratch, no epilogue copy).
    k = pl.program_id(2)

    @pl.when(k == 0)
    def _init():
        o_ref[...] = jnp.broadcast_to(b_ref[...], o_ref.shape)

    o_ref[...] += jnp.dot(x_ref[...], wt_ref[...],
                          preferred_element_type=jnp.float32)


def _linear_kernel_multi_k_cast_out(x_ref, wt_ref, b_ref, o_ref, acc_ref):
    # Output narrower than f32: keep an f32 accumulator, cast once at the end.
    k = pl.program_id(2)

    @pl.when(k == 0)
    def _init():
        acc_ref[...] = jnp.zeros_like(acc_ref)

    acc_ref[...] += jnp.dot(x_ref[...], wt_ref[...],
                            preferred_element_type=jnp.float32)

    @pl.when(k == pl.num_programs(2) - 1)
    def _finalize():
        o_ref[...] = (acc_ref[...] + b_ref[...]).astype(o_ref.dtype)


# --------------------------------------------------------------------------- #
# module wrapper
# --------------------------------------------------------------------------- #
class PallasLinear:
    """y = x @ W.T + b (PyTorch nn.Linear forward) with one-time weight prep."""

    def __init__(self, w, b, *, weight_dtype=None,
                 tm_max=1024, tn_max=512, tk_max=2048):
        d_out, d_in = w.shape
        assert b.shape == (d_out,)
        self.d_in, self.d_out = d_in, d_out

        self.vmem_budget, self.vmem_limit = _vmem_budget_bytes()

        # ---- tile caps, shrunk ((8,128)-aligned) until the double-buffered
        #      worst-case working set fits the per-generation VMEM budget ----
        w_bytes = np.dtype(weight_dtype if weight_dtype is not None
                           else w.dtype).itemsize
        tk = min(tk_max, _round_up(d_in, 128))
        tn = min(tn_max, _round_up(d_out, 128))
        tm_cap = max(_round_up(tm_max, 8), 8)
        while _working_set_bytes(tm_cap, tn, tk, 4, w_bytes, 4) > self.vmem_budget:
            if tk > 128 and tk >= tn:
                tk = max(128, _round_up(tk // 2, 128))
            elif tn > 128:
                tn = max(128, _round_up(tn // 2, 128))
            elif tm_cap > 8:
                tm_cap = max(8, tm_cap // 2)
            else:
                break
        self.tk, self.tn, self.tm_cap = tk, tn, tm_cap

        # ---- one-time weight preparation (outside the per-call hot path):
        #      transpose to MXU-native (K, N) and zero-pad to tile multiples.
        #      Zero padding is exact for the dot; padded output cols are
        #      sliced away in __call__.
        self.k_pad = _round_up(d_in, tk)
        self.n_pad = _round_up(d_out, tn)
        wt = w.T
        if weight_dtype is not None:
            wt = wt.astype(weight_dtype)
        self.wt_p = jnp.pad(wt, ((0, self.k_pad - d_in),
                                 (0, self.n_pad - d_out)))
        self.b_p = jnp.pad(b.astype(jnp.float32),
                           (0, self.n_pad - d_out)).reshape(1, self.n_pad)
        # TODO(synk): optional fp8 weight path for v7x (offline quant + scale
        # folded into the f32 epilogue) is not implemented here.

    def __call__(self, x):
        batch, d_in = x.shape
        assert d_in == self.d_in
        out_dtype = x.dtype
        out_bytes = np.dtype(out_dtype).itemsize

        # tm: sublane-aligned for the activation dtype, sized to minimise
        # batch-padding waste instead of blindly using the cap.
        sublane = _sublane_multiple(out_dtype)
        n_row_tiles = _cdiv(batch, self.tm_cap)
        tm = min(self.tm_cap, _round_up(_cdiv(batch, n_row_tiles), sublane))
        tm = max(tm, sublane)
        b_pad = _round_up(batch, tm)

        # tn: if the grid would collapse to one tile, split N so both of
        # v7x's TensorCores get work (harmless no-op on 1-TC v5e/v6e).
        tn = self.tn
        if (b_pad // tm == 1 and self.n_pad // tn == 1
                and tn >= 256 and (tn // 2) % 128 == 0):
            tn = tn // 2

        # x is consumed directly from HBM when already tile-aligned.
        if b_pad == batch and self.k_pad == d_in:
            x_p = x
        else:
            x_p = jnp.pad(x, ((0, b_pad - batch), (0, self.k_pad - d_in)))

        n_k = self.k_pad // self.tk
        cost = pl.CostEstimate(
            flops=2 * b_pad * self.k_pad * self.n_pad,
            transcendentals=0,
            bytes_accessed=(x_p.size * x_p.dtype.itemsize
                            + self.wt_p.size * self.wt_p.dtype.itemsize
                            + self.b_p.size * self.b_p.dtype.itemsize
                            + b_pad * self.n_pad * out_bytes),
        )

        if n_k == 1:
            # Whole K fits in one tile: 2-D grid, no reduction axis at all.
            grid = (b_pad // tm, self.n_pad // tn)
            kernel = _linear_kernel_single_k
            in_specs = [
                pl.BlockSpec((tm, self.tk), lambda i, j: (i, 0)),   # x tile
                pl.BlockSpec((self.tk, tn), lambda i, j: (0, j)),   # W.T tile
                pl.BlockSpec((1, tn), lambda i, j: (0, j)),         # bias
            ]
            out_specs = pl.BlockSpec((tm, tn), lambda i, j: (i, j))
            scratch_shapes = []
            dims = ("parallel", "parallel")
        else:
            grid = (b_pad // tm, self.n_pad // tn, n_k)
            in_specs = [
                pl.BlockSpec((tm, self.tk), lambda i, j, k: (i, k)),
                pl.BlockSpec((self.tk, tn), lambda i, j, k: (k, j)),
                pl.BlockSpec((1, tn), lambda i, j, k: (0, j)),
            ]
            out_specs = pl.BlockSpec((tm, tn), lambda i, j, k: (i, j))
            dims = ("parallel", "parallel", "arbitrary")
            if out_dtype == jnp.float32:
                kernel = _linear_kernel_multi_k_f32_out
                scratch_shapes = []
            else:
                kernel = _linear_kernel_multi_k_cast_out
                scratch_shapes = [pltpu.VMEM((tm, tn), jnp.float32)]

        out_p = pl.pallas_call(
            kernel,
            out_shape=jax.ShapeDtypeStruct((b_pad, self.n_pad), out_dtype),
            grid_spec=pltpu.PrefetchScalarGridSpec(
                num_scalar_prefetch=0,
                grid=grid,
                in_specs=in_specs,
                out_specs=out_specs,
                scratch_shapes=scratch_shapes,
            ),
            compiler_params=pltpu.CompilerParams(
                dimension_semantics=dims,
                vmem_limit_bytes=int(self.vmem_limit),
            ),
            cost_estimate=cost,
        )(x_p, self.wt_p, self.b_p)

        if b_pad == batch and self.n_pad == self.d_out:
            return out_p
        return out_p[:batch, :self.d_out]


# --------------------------------------------------------------------------- #
# demo / self-test
# --------------------------------------------------------------------------- #
if __name__ == "__main__":
    batch, input_dim, output_dim = 8, 32, 16

    key = jax.random.PRNGKey(0)
    kx, kw, kb, kx3, kw3, kb3 = jax.random.split(key, 6)

    x = jax.random.normal(kx, (batch, input_dim), dtype=jnp.float32)
    bound = 1.0 / jnp.sqrt(jnp.float32(input_dim))
    w = jax.random.uniform(kw, (output_dim, input_dim), dtype=jnp.float32,
                           minval=-bound, maxval=bound)
    b = jax.random.uniform(kb, (output_dim,), dtype=jnp.float32,
                           minval=-bound, maxval=bound)
    ref = x @ w.T + b

    # f32 path (single-K-tile kernel, no reduction grid axis).
    layer = PallasLinear(w, b)           # one-time weight transpose + pad
    out = layer(x)
    jax.block_until_ready(out)
    assert out.shape == (batch, output_dim)
    assert jnp.allclose(out, ref, atol=1e-5, rtol=1e-5)

    # bf16 path: weights prepared once in bf16, activations already bf16
    # upstream (no per-call cast pass in the wrapper).
    layer_bf16 = PallasLinear(w, b, weight_dtype=jnp.bfloat16)
    out_bf16 = layer_bf16(x.astype(jnp.bfloat16))
    jax.block_until_ready(out_bf16)
    assert out_bf16.shape == (batch, output_dim)
    assert jnp.allclose(out_bf16.astype(jnp.float32), ref, atol=2e-2, rtol=2e-2)

    # Multi-K-step path (forced with tk_max=128): exercises the resident-output
    # f32 accumulation kernel and the scratch/cast kernel.
    input_dim3 = 256
    x3 = jax.random.normal(kx3, (batch, input_dim3), dtype=jnp.float32)
    bound3 = 1.0 / jnp.sqrt(jnp.float32(input_dim3))
    w3 = jax.random.uniform(kw3, (output_dim, input_dim3), dtype=jnp.float32,
                            minval=-bound3, maxval=bound3)
    b3 = jax.random.uniform(kb3, (output_dim,), dtype=jnp.float32,
                            minval=-bound3, maxval=bound3)
    ref3 = x3 @ w3.T + b3

    layer3 = PallasLinear(w3, b3, tk_max=128)          # 2 K steps, f32 out
    out3 = layer3(x3)
    jax.block_until_ready(out3)
    assert out3.shape == (batch, output_dim)
    assert jnp.allclose(out3, ref3, atol=5e-4, rtol=5e-4)

    layer3_bf = PallasLinear(w3, b3, weight_dtype=jnp.bfloat16, tk_max=128)
    out3_bf = layer3_bf(x3.astype(jnp.bfloat16))       # 2 K steps, bf16 out
    jax.block_until_ready(out3_bf)
    assert out3_bf.shape == (batch, output_dim)
    assert jnp.allclose(out3_bf.astype(jnp.float32), ref3, atol=5e-2, rtol=5e-2)

    print("KERNEL_OK")
</pallas_src>

<mosaic_0001>
module attributes {stable_mosaic.version = 11 : i64} {
  func.func @_linear_kernel_single_k(%arg0: i32, %arg1: i32, %arg2: memref<8x128xf32, #tpu.memory_space<vmem>>, %arg3: memref<128x128xf32, #tpu.memory_space<vmem>>, %arg4: memref<1x128xf32, #tpu.memory_space<vmem>>, %arg5: memref<8x128xf32, #tpu.memory_space<vmem>>) attributes {dimension_semantics = [#tpu.dimension_semantics<parallel>, #tpu.dimension_semantics<parallel>], iteration_bounds = array<i64: 1, 1>, scalar_prefetch = 0 : i64, scratch_operands = 0 : i64, tpu.core_type = #tpu.core_type<tc>, window_params = [{transform_indices = @transform_0, window_bounds = array<i64: 8, 128>}, {transform_indices = @transform_1, window_bounds = array<i64: 128, 128>}, {transform_indices = @transform_2, window_bounds = array<i64: 1, 128>}, {transform_indices = @transform_3, window_bounds = array<i64: 8, 128>}]} {
    %c0 = arith.constant 0 : index
    %c0_0 = arith.constant 0 : index
    %0 = vector.load %arg2[%c0, %c0_0] : memref<8x128xf32, #tpu.memory_space<vmem>>, vector<8x128xf32>
    %c0_1 = arith.constant 0 : index
    %c0_2 = arith.constant 0 : index
    %1 = vector.load %arg3[%c0_1, %c0_2] : memref<128x128xf32, #tpu.memory_space<vmem>>, vector<128x128xf32>
    %cst = arith.constant dense<0.000000e+00> : vector<8x128xf32>
    %2 = tpu.matmul %0, %1, %cst {dimension_numbers = #tpu.dot_dimension_numbers<[1], [0], [0], [1], [0, 0, 1, 1], [], []>} : vector<8x128xf32>, vector<128x128xf32>, vector<8x128xf32> -> vector<8x128xf32>
    %c0_3 = arith.constant 0 : index
    %c0_4 = arith.constant 0 : index
    %3 = vector.load %arg4[%c0_3, %c0_4] : memref<1x128xf32, #tpu.memory_space<vmem>>, vector<1x128xf32>
    %4 = vector.broadcast %3 : vector<1x128xf32> to vector<8x128xf32>
    %5 = arith.addf %2, %4 : vector<8x128xf32>
    %c0_5 = arith.constant 0 : index
    %c0_6 = arith.constant 0 : index
    %6 = vector.load %arg5[%c0_5, %c0_6] : memref<8x128xf32, #tpu.memory_space<vmem>>, vector<8x128xf32>
    tpu.vector_store %arg5[%c0_5, %c0_6], %5 {strides = array<i32>} : memref<8x128xf32, #tpu.memory_space<vmem>>, vector<8x128xf32>,
    return
  }
  func.func @transform_0(%arg0: i32, %arg1: i32) -> (i32, i32) {
    %c0_i32 = arith.constant 0 : i32
    %c0_i32_0 = arith.constant 0 : i32
    return %arg0, %c0_i32 : i32, i32
  }
  func.func @transform_1(%arg0: i32, %arg1: i32) -> (i32, i32) {
    %c0_i32 = arith.constant 0 : i32
    %c0_i32_0 = arith.constant 0 : i32
    return %c0_i32, %arg1 : i32, i32
  }
  func.func @transform_2(%arg0: i32, %arg1: i32) -> (i32, i32) {
    %c0_i32 = arith.constant 0 : i32
    %c0_i32_0 = arith.constant 0 : i32
    return %c0_i32, %arg1 : i32, i32
  }
  func.func @transform_3(%arg0: i32, %arg1: i32) -> (i32, i32) {
    %c0_i32 = arith.constant 0 : i32
    return %arg0, %arg1 : i32, i32
  }
}

</mosaic_0001>

<llo_original>
// kernel: tpu_custom_call.1
$region0: #{tpu_custom_call.1}
  #allocation0 [shape = 'u32[]', space=smem, size = 0x4, offset = 0x4, fixed_abs, tag = 'smem constant byte address 0x4 - core index']
  #allocation1 [shape = 'u32[144,128]{1,0:T(1,128)}', space=vmem, size = 0x12000, scoped, tag = 'internal scratch']
  %s0 = inlined_call_operand.hbm [shape: f32[8,128], index: 0, kind: input, shape index: {}]
  %s1 = inlined_call_operand.hbm [shape: f32[128,128], index: 1, kind: input, shape index: {}]
  %s2 = inlined_call_operand.vmem [shape: f32[1,128], index: 2, kind: input, shape index: {}]
  %s3 = inlined_call_operand.hbm [shape: f32[8,128], index: 3, kind: output, shape index: {}]
  %s4 = sld [smem:[#allocation0]]
  $region30: #{tpu_custom_call.1} parent=0
    _
  %s6 = ssub.s32 1, %s4
  %s7 = scalar_select 0, %s6, %s4
  $region1: #{tpu_custom_call.1} parent=0
    #allocation2 [shape = 'u8[4096]{0}', space=vmem, size = 0x1000, scoped, tag = 'input window, operand 0, single buffered']
    #allocation3 [shape = 's32[1]{0}', space=sflag, size = 0x4, scoped, tag = 'scoped memory for tpu_custom_call.1']
    #allocation4 [shape = 's32[1]{0}', space=sflag, size = 0x4, scoped, tag = 'scoped memory for tpu_custom_call.1']
    #allocation5 [shape = 'u8[65536]{0}', space=vmem, size = 0x10000, scoped, tag = 'input window, operand 1, single buffered']
    #allocation6 [shape = 's32[1]{0}', space=sflag, size = 0x4, scoped, tag = 'scoped memory for tpu_custom_call.1']
    #allocation7 [shape = 'u8[4096]{0}', space=vmem, size = 0x1000, scoped, tag = 'output window, operand 0, single buffered']
    %8 = vsyncpa [#allocation3], 0
    %9 = vsyncpa [#allocation6], 0
    %10 = vsyncpa [#allocation4], 0
    // Predicated region
    $region2: #{tpu_custom_call.1} parent=1 // pred_check
      _
    $region3: #{tpu_custom_call.1} parent=1 // pred_check_branch
      %12 = sbr.rel (0) target = $region5
    $region4: #{tpu_custom_call.1} parent=1 // pred_region
      %s14 = ssub.s32 128, 128
      %15 = vsyncadd [#allocation3], %s14
      %s17 = sshll.u32 [#allocation2], 4
      %s18 = int_to_ptr.vmem [resolvable:$true] %s17
      %20 = dma.hbm_to_vmem [thread:$0]  %s0, 128, %s18, [#allocation3]
    $region5: #{tpu_custom_call.1} parent=1 // pred_fallthru
      _
    // Predicated region
    $region6: #{tpu_custom_call.1} parent=1 // pred_check
      _
    $region7: #{tpu_custom_call.1} parent=1 // pred_check_branch
      %22 = sbr.rel (0) target = $region9
    $region8: #{tpu_custom_call.1} parent=1 // pred_region
      %s24 = ssub.s32 2048, 2048
      %25 = vsyncadd [#allocation6], %s24
      %s26 = sshll.u32 [#allocation5], 4
      %s27 = int_to_ptr.vmem [resolvable:$true] %s26
      %32 = dma.hbm_to_vmem [thread:$0]  %s1, 2048, %s27, [#allocation6], 128, 128, 8
    $region9: #{tpu_custom_call.1} parent=1 // pred_fallthru
      _
    // Predicated region
    $region10: #{tpu_custom_call.1} parent=1 // pred_check
      _
    $region11: #{tpu_custom_call.1} parent=1 // pred_check_branch
      %34 = sbr.rel (0) target = $region13
    $region12: #{tpu_custom_call.1} parent=1 // pred_region
      _
    $region13: #{tpu_custom_call.1} parent=1 // pred_fallthru
      _
    // Predicated region
    $region14: #{tpu_custom_call.1} parent=1 // pred_check
      _
    $region15: #{tpu_custom_call.1} parent=1 // pred_check_branch
      %36 = sbr.rel (0) target = $region17
    $region16: #{tpu_custom_call.1} parent=1 // pred_region
      %37 = dma.done [#allocation3], 128
    $region17: #{tpu_custom_call.1} parent=1 // pred_fallthru
      _
    // Predicated region
    $region18: #{tpu_custom_call.1} parent=1 // pred_check
      _
    $region19: #{tpu_custom_call.1} parent=1 // pred_check_branch
      %39 = sbr.rel (0) target = $region21
    $region20: #{tpu_custom_call.1} parent=1 // pred_region
      %40 = dma.done [#allocation6], 2048
    $region21: #{tpu_custom_call.1} parent=1 // pred_fallthru
      _
    %v41 = vld [vmem:[#allocation2] sm:$0xff]
    %v42 = vld [vmem:[#allocation5] sm:$0xff]
    %v43 = vld [vmem:[#allocation5 + $0x8] sm:$0xff]
    %v44 = vld [vmem:[#allocation5 + $0x10] sm:$0xff]
    %v45 = vld [vmem:[#allocation5 + $0x18] sm:$0xff]
    %v46 = vld [vmem:[#allocation5 + $0x20] sm:$0xff]
    %v47 = vld [vmem:[#allocation5 + $0x28] sm:$0xff]
    %v48 = vld [vmem:[#allocation5 + $0x30] sm:$0xff]
    %v49 = vld [vmem:[#allocation5 + $0x38] sm:$0xff]
    %v50 = vld [vmem:[#allocation5 + $0x40] sm:$0xff]
    %v51 = vld [vmem:[#allocation5 + $0x48] sm:$0xff]
    %v52 = vld [vmem:[#allocation5 + $0x50] sm:$0xff]
    %v53 = vld [vmem:[#allocation5 + $0x58] sm:$0xff]
    %v54 = vld [vmem:[#allocation5 + $0x60] sm:$0xff]
    %v55 = vld [vmem:[#allocation5 + $0x68] sm:$0xff]
    %v56 = vld [vmem:[#allocation5 + $0x70] sm:$0xff]
    %v57 = vld [vmem:[#allocation5 + $0x78] sm:$0xff]
    %v58 = vld [vmem:[%s2] sm:$0x1]
    %v60 = vlaneseq
    %v61 = vshrl.u32 %v60, 7
    %v62 = vsub.s32 0, %v61
    %v63 = vrot.slane %v58, %v62
    %65 = vmatprep.subr.mxu0 0.0
    %66 = vmatpush1.msra.mxu0 %v42
    %67 = vmatprep.subr.mxu0 0.0
    %68 = vmatpush1.msra.mxu0 %v43
    %69 = vmatprep.subr.mxu0 0.0
    %70 = vmatpush1.msra.mxu0 %v44
    %71 = vmatprep.subr.mxu0 0.0
    %72 = vmatpush1.msra.mxu0 %v45
    %73 = vmatprep.subr.mxu0 0.0
    %74 = vmatpush1.msra.mxu0 %v46
    %75 = vmatprep.subr.mxu0 0.0
    %76 = vmatpush1.msra.mxu0 %v47
    %77 = vmatprep.subr.mxu0 0.0
    %78 = vmatpush1.msra.mxu0 %v48
    %79 = vmatprep.subr.mxu0 0.0
    %80 = vmatpush1.msra.mxu0 %v49
    %81 = vmatprep.subr.mxu0 0.0
    %82 = vmatpush1.msra.mxu0 %v50
    %83 = vmatprep.subr.mxu0 0.0
    %84 = vmatpush1.msra.mxu0 %v51
    %85 = vmatprep.subr.mxu0 0.0
    %86 = vmatpush1.msra.mxu0 %v52
    %87 = vmatprep.subr.mxu0 0.0
    %88 = vmatpush1.msra.mxu0 %v53
    %89 = vmatprep.subr.mxu0 0.0
    %90 = vmatpush1.msra.mxu0 %v54
    %91 = vmatprep.subr.mxu0 0.0
    %92 = vmatpush1.msra.mxu0 %v55
    %93 = vmatprep.subr.mxu0 0.0
    %94 = vmatpush1.msra.mxu0 %v56
    %95 = vmatprep.subr.mxu0 0.0
    %96 = vmatpush1.msra.mxu0 %v57
    %97 = vmatprep.subr.mxu0 0.0
    %98 = vmatpush1.msra.mxu0 0.0
    %99 = vmatprep.subr.mxu0 0.0
    %100 = vmatpush1.msra.mxu0 0.0
    %101 = vmatprep.subr.mxu0 0.0
    %102 = vmatpush1.msra.mxu0 0.0
    %103 = vmatprep.subr.mxu0 0.0
    %104 = vmatpush1.msra.mxu0 0.0
    %105 = vmatprep.subr.mxu0 0.0
    %106 = vmatpush1.msra.mxu0 0.0
    %107 = vmatprep.subr.mxu0 0.0
    %108 = vmatpush1.msra.mxu0 0.0
    %109 = vmatprep.subr.mxu0 0.0
    %110 = vmatpush1.msra.mxu0 0.0
    %111 = vmatprep.subr.mxu0 0.0
    %112 = vmatpush1.msra.mxu0 0.0
    %113 = vmatprep.subr.mxu0 0.0
    %114 = vmatpush1.msra.mxu0 0.0
    %115 = vmatprep.subr.mxu0 0.0
    %116 = vmatpush1.msra.mxu0 0.0
    %117 = vmatprep.subr.mxu0 0.0
    %118 = vmatpush1.msra.mxu0 0.0
    %119 = vmatprep.subr.mxu0 0.0
    %120 = vmatpush1.msra.mxu0 0.0
    %121 = vmatprep.subr.mxu0 0.0
    %122 = vmatpush1.msra.mxu0 0.0
    %123 = vmatprep.subr.mxu0 0.0
    %124 = vmatpush1.msra.mxu0 0.0
    %125 = vmatprep.subr.mxu0 0.0
    %126 = vmatpush1.msra.mxu0 0.0
    %127 = vmatprep.subr.mxu0 0.0
    %128 = vmatpush1.msra.mxu0 0.0
    %129 = vmatprep.mubr.f32.mxu0 0.0
    %130 = vmatmul.mubr.f32.gmra.mrb[0].mxu0 %v41
    %v131 = vpop.f32.mrb[0].mxu0
    %v132 = vadd.f32 %v63, %v131
    %v133 = vpop.f32.mrb[0].mxu0
    %134 = vdwg.mxu0
    %135 = vst [vmem:[#allocation7] sm:$0xff] %v132
    // Predicated region
    $region22: #{tpu_custom_call.1} parent=1 // pred_check
      _
    $region23: #{tpu_custom_call.1} parent=1 // pred_check_branch
      %137 = sbr.rel (0) target = $region25
    $region24: #{tpu_custom_call.1} parent=1 // pred_region
      %s139 = ssub.s32 128, 128
      %140 = vsyncadd [#allocation4], %s139
      %s142 = sshll.u32 [#allocation7], 4
      %s143 = int_to_ptr.vmem [resolvable:$true] %s142
      %145 = dma.vmem_to_hbm [thread:$0]  %s143, 128, %s3, [#allocation4]
    $region25: #{tpu_custom_call.1} parent=1 // pred_fallthru
      _
    // Predicated region
    $region26: #{tpu_custom_call.1} parent=1 // pred_check
      _
    $region27: #{tpu_custom_call.1} parent=1 // pred_check_branch
      %147 = sbr.rel (0) target = $region29
    $region28: #{tpu_custom_call.1} parent=1 // pred_region
      %148 = dma.done [#allocation4], 128
    $region29: #{tpu_custom_call.1} parent=1 // pred_fallthru
      _
    %149 = vsyncpa [#allocation3], 1
    %150 = vsyncpa [#allocation6], 1
    %151 = vsyncpa [#allocation4], 1

</llo_original>
